<compile_context>
chip_gen: v6e
topology: v6e:2x2x1
jax: 0.10.0
libtpu: 0.0.40
codegen_flags: <defaults>
</compile_context>

<pallas_src>
import functools

import jax
import jax.numpy as jnp
from jax.experimental import pallas as pl
from jax.experimental.pallas import tpu as pltpu


def _round_up(v, m):
    return (v + m - 1) // m * m


def _fused_kernel(x_ref, w_ref, o_ref, acc_ref):
    # x_ref:   (tm, tk)     bf16 activation tile
    # w_ref:   (tk, n_pad)  bf16 fused weight tile (n_pad = 8, zero past col 7)
    # o_ref:   (tm, n_pad)  f32 output tile
    # acc_ref: (tm, n_pad)  f32 accumulator scratch (resident across k)
    k = pl.program_id(1)

    @pl.when(k == 0)
    def _():
        acc_ref[...] = jnp.zeros_like(acc_ref)

    acc_ref[...] += jnp.dot(
        x_ref[...], w_ref[...], preferred_element_type=jnp.float32
    )

    @pl.when(k == pl.num_programs(1) - 1)
    def _():
        o_ref[...] = acc_ref[...]


def prepare_params(head_ws, head_bs, fc_w, fc_b, *, tk=8192):
    """One-time weight prep (hoisted out of the per-call path).

    Fuses the 7 linear heads + fc into a single (d_pad, 8) bf16 weight (lane
    axis padded 7->8 only) and a (7,) f32 bias.  Returns the reduction tile tk
    actually used so the forward pass cannot silently mismatch it.
    """
    D = head_ws[0].shape[0]
    wh = jnp.concatenate(head_ws, axis=1)            # (D, 49)
    bh = jnp.concatenate(head_bs, axis=0)            # (49,)
    w_fused = wh @ fc_w                              # (D, 7)
    b_fused = bh @ fc_w + fc_b                       # (7,)
    n_out = w_fused.shape[1]

    # Large reduction tile to amortize per-step pipeline overhead, but never
    # bigger than D rounded up to 512 (small models -> single k-step, no pad).
    tk = min(tk, _round_up(D, 512))
    d_pad = _round_up(D, tk)

    n_pad = _round_up(n_out, 8)                      # 7 -> 8 lanes, not 128
    w_pad = jnp.zeros((d_pad, n_pad), jnp.float32).at[:D, :n_out].set(w_fused)
    return w_pad.astype(jnp.bfloat16), b_fused.astype(jnp.float32), n_out, tk


@functools.partial(jax.jit, static_argnames=("n_out", "tk"))
def multiple_model_forward(x_nchw, w_pad, b_fused, *, n_out, tk):
    B, C, H, W = x_nchw.shape
    D = C * H * W
    d_pad, n_pad = w_pad.shape
    if d_pad % tk != 0:
        raise ValueError(
            f"tk={tk} does not divide d_pad={d_pad}; use the tk returned by "
            "prepare_params."
        )

    # bf16 packs 16 rows per sublane group -> round the batch tile to 16.
    tm = min(128, _round_up(B, 16))
    b_padded = _round_up(B, tm)

    x = x_nchw.reshape(B, D).astype(jnp.bfloat16)    # same order as torch .view(B,-1)
    x = jnp.pad(x, ((0, b_padded - B), (0, d_pad - D)))

    grid = (b_padded // tm, d_pad // tk)

    out = pl.pallas_call(
        _fused_kernel,
        out_shape=jax.ShapeDtypeStruct((b_padded, n_pad), jnp.float32),
        grid_spec=pltpu.PrefetchScalarGridSpec(
            num_scalar_prefetch=0,
            grid=grid,
            in_specs=[
                pl.BlockSpec((tm, tk), lambda i, k: (i, k)),       # activations
                pl.BlockSpec((tk, n_pad), lambda i, k: (k, 0)),    # fused W (narrow)
            ],
            out_specs=pl.BlockSpec((tm, n_pad), lambda i, k: (i, 0)),
            scratch_shapes=[pltpu.VMEM((tm, n_pad), jnp.float32)],
        ),
        compiler_params=pltpu.CompilerParams(
            dimension_semantics=("parallel", "arbitrary"),
            vmem_limit_bytes=32 * 1024 * 1024,
        ),
    )(x, w_pad)

    # Bias is 7 floats: add it in the wrapper (no third DMA stream in-kernel).
    return out[:B, :n_out] + b_fused


if __name__ == "__main__":
    key = jax.random.PRNGKey(0)
    B, C, H, W = 2, 4, 16, 16
    D = C * H * W
    N_HEADS, HEAD_OUT, FC_OUT = 7, 7, 7

    keys = jax.random.split(key, 2 * N_HEADS + 3)
    x = jax.random.normal(keys[0], (B, C, H, W), dtype=jnp.float32)

    head_ws = [
        jax.random.normal(keys[1 + i], (D, HEAD_OUT), dtype=jnp.float32) * 0.02
        for i in range(N_HEADS)
    ]
    head_bs = [
        jax.random.normal(keys[1 + N_HEADS + i], (HEAD_OUT,), dtype=jnp.float32) * 0.02
        for i in range(N_HEADS)
    ]
    fc_w = jax.random.normal(keys[-2], (N_HEADS * HEAD_OUT, FC_OUT), dtype=jnp.float32) * 0.1
    fc_b = jax.random.normal(keys[-1], (FC_OUT,), dtype=jnp.float32) * 0.1

    # one-time weight prep (cached across forward calls)
    w_pad, b_fused, n_out, tk = prepare_params(head_ws, head_bs, fc_w, fc_b)

    y = multiple_model_forward(x, w_pad, b_fused, n_out=n_out, tk=tk)
    y = jax.block_until_ready(y)

    # reference in plain f32 JAX (same math as the PyTorch forward, unfused)
    x_flat = x.reshape(B, D)
    parts = [x_flat @ head_ws[i] + head_bs[i] for i in range(N_HEADS)]
    ref = jnp.concatenate(parts, axis=1) @ fc_w + fc_b

    assert y.shape == (B, FC_OUT)
    # bf16 operands + fused reassociation -> slightly looser tolerance
    assert jnp.allclose(y, ref, atol=2e-2, rtol=2e-2), (
        f"max abs err {jnp.max(jnp.abs(y - ref))}"
    )

    print("KERNEL_OK")
</pallas_src>

<mosaic_0001>
module attributes {stable_mosaic.version = 11 : i64} {
  func.func @_fused_kernel(%arg0: i32, %arg1: i32, %arg2: memref<16x1024xbf16, #tpu.memory_space<vmem>>, %arg3: memref<1024x8xbf16, #tpu.memory_space<vmem>>, %arg4: memref<16x8xf32, #tpu.memory_space<vmem>>, %arg5: memref<16x8xf32, #tpu.memory_space<vmem>>) attributes {dimension_semantics = [#tpu.dimension_semantics<parallel>, #tpu.dimension_semantics<arbitrary>], iteration_bounds = array<i64: 1, 1>, scalar_prefetch = 0 : i64, scratch_operands = 1 : i64, tpu.core_type = #tpu.core_type<tc>, window_params = [{transform_indices = @transform_0, window_bounds = array<i64: 16, 1024>}, {transform_indices = @transform_1, window_bounds = array<i64: 1024, 8>}, {transform_indices = @transform_2, window_bounds = array<i64: 16, 8>}]} {
    %c0_i32 = arith.constant 0 : i32
    %0 = arith.cmpi eq, %arg1, %c0_i32 : i32
    %1 = arith.extui %0 : i1 to i32
    %c0_i32_0 = arith.constant 0 : i32
    %2 = arith.cmpi ne, %1, %c0_i32_0 : i32
    scf.if %2 {
      %cst_10 = arith.constant 0.000000e+00 : f32
      %12 = vector.broadcast %cst_10 : f32 to vector<16x8xf32>
      %c0_11 = arith.constant 0 : index
      %c0_12 = arith.constant 0 : index
      %13 = vector.load %arg5[%c0_11, %c0_12] : memref<16x8xf32, #tpu.memory_space<vmem>>, vector<16x8xf32>
      tpu.vector_store %arg5[%c0_11, %c0_12], %12 {strides = array<i32>} : memref<16x8xf32, #tpu.memory_space<vmem>>, vector<16x8xf32>,
    } else {
    }
    %c0 = arith.constant 0 : index
    %c0_1 = arith.constant 0 : index
    %3 = vector.load %arg5[%c0, %c0_1] : memref<16x8xf32, #tpu.memory_space<vmem>>, vector<16x8xf32>
    %c0_2 = arith.constant 0 : index
    %c0_3 = arith.constant 0 : index
    %4 = vector.load %arg2[%c0_2, %c0_3] : memref<16x1024xbf16, #tpu.memory_space<vmem>>, vector<16x1024xbf16>
    %c0_4 = arith.constant 0 : index
    %c0_5 = arith.constant 0 : index
    %5 = vector.load %arg3[%c0_4, %c0_5] : memref<1024x8xbf16, #tpu.memory_space<vmem>>, vector<1024x8xbf16>
    %cst = arith.constant dense<0.000000e+00> : vector<16x8xf32>
    %6 = tpu.matmul %4, %5, %cst {dimension_numbers = #tpu.dot_dimension_numbers<[1], [0], [0], [1], [0, 0, 1, 1], [], []>} : vector<16x1024xbf16>, vector<1024x8xbf16>, vector<16x8xf32> -> vector<16x8xf32>
    %7 = arith.addf %3, %6 : vector<16x8xf32>
    %c0_6 = arith.constant 0 : index
    %c0_7 = arith.constant 0 : index
    %8 = vector.load %arg5[%c0_6, %c0_7] : memref<16x8xf32, #tpu.memory_space<vmem>>, vector<16x8xf32>
    tpu.vector_store %arg5[%c0_6, %c0_7], %7 {strides = array<i32>} : memref<16x8xf32, #tpu.memory_space<vmem>>, vector<16x8xf32>,
    %c0_i32_8 = arith.constant 0 : i32
    %9 = arith.cmpi eq, %arg1, %c0_i32_8 : i32
    %10 = arith.extui %9 : i1 to i32
    %c0_i32_9 = arith.constant 0 : i32
    %11 = arith.cmpi ne, %10, %c0_i32_9 : i32
    scf.if %11 {
      %c0_10 = arith.constant 0 : index
      %c0_11 = arith.constant 0 : index
      %12 = vector.load %arg5[%c0_10, %c0_11] : memref<16x8xf32, #tpu.memory_space<vmem>>, vector<16x8xf32>
      %c0_12 = arith.constant 0 : index
      %c0_13 = arith.constant 0 : index
      %13 = vector.load %arg4[%c0_12, %c0_13] : memref<16x8xf32, #tpu.memory_space<vmem>>, vector<16x8xf32>
      tpu.vector_store %arg4[%c0_12, %c0_13], %12 {strides = array<i32>} : memref<16x8xf32, #tpu.memory_space<vmem>>, vector<16x8xf32>,
    } else {
    }
    return
  }
  func.func @transform_0(%arg0: i32, %arg1: i32) -> (i32, i32) {
    %c0_i32 = arith.constant 0 : i32
    return %arg0, %arg1 : i32, i32
  }
  func.func @transform_1(%arg0: i32, %arg1: i32) -> (i32, i32) {
    %c0_i32 = arith.constant 0 : i32
    %c0_i32_0 = arith.constant 0 : i32
    return %arg1, %c0_i32 : i32, i32
  }
  func.func @transform_2(%arg0: i32, %arg1: i32) -> (i32, i32) {
    %c0_i32 = arith.constant 0 : i32
    %c0_i32_0 = arith.constant 0 : i32
    return %arg0, %c0_i32 : i32, i32
  }
}

</mosaic_0001>

<llo_original>
// kernel: multiple_model_forward.1
$region0: #{multiple_model_forward.1}
  #allocation0 [shape = 'u32[]', space=smem, size = 0x4, offset = 0x4, fixed_abs, tag = 'smem constant byte address 0x4 - core index']
  #allocation1 [shape = 'u32[144,128]{1,0:T(1,128)}', space=vmem, size = 0x12000, scoped, tag = 'internal scratch']
  #allocation2 [shape = 'f32[16,8]{1,0:T(8,128)}', space=vmem, size = 0x2000, scoped, tag = 'scratch operand']
  %s0 = inlined_call_operand.vmem [shape: bf16[16,1024], index: 0, kind: input, shape index: {}]
  %s1 = inlined_call_operand.vmem [shape: bf16[1024,8], index: 1, kind: input, shape index: {}]
  %s2 = inlined_call_operand.vmem [shape: f32[16,8], index: 2, kind: output, shape index: {}]
  %s3 = sld [smem:[#allocation0]]
  $region26: #{multiple_model_forward.1} parent=0
    _
  %s5 = ssub.s32 1, %s3
  %s6 = scalar_select 0, %s5, %s3
  // Predicated region
  $region2: #{multiple_model_forward.1} parent=0 // pred_check
    _
  $region3: #{multiple_model_forward.1} parent=0 // pred_check_branch
    %8 = sbr.rel (0) target = $region5
  $region4: #{multiple_model_forward.1} parent=0 // pred_region
    _
  $region5: #{multiple_model_forward.1} parent=0 // pred_fallthru
    _
  // Predicated region
  $region6: #{multiple_model_forward.1} parent=0 // pred_check
    _
  $region7: #{multiple_model_forward.1} parent=0 // pred_check_branch
    %10 = sbr.rel (0) target = $region9
  $region8: #{multiple_model_forward.1} parent=0 // pred_region
    _
  $region9: #{multiple_model_forward.1} parent=0 // pred_fallthru
    _
  %p12 = scmp.eq.s32.totalorder 0, 0
  // Predicated region
  $region10: #{multiple_model_forward.1} parent=0 // pred_check
    %p13 = pneg %p12
  $region11: #{multiple_model_forward.1} parent=0 // pred_check_branch
    %15 = sbr.rel (%p13) target = $region13
  $region12: #{multiple_model_forward.1} parent=0 // pred_region
    %vm16 = vcmask 64512
    %17 = vst.msk [vmem:[#allocation2] sm:$0xff] %vm16, 0.0
    %18 = vst.msk [vmem:[#allocation2 + $0x8] sm:$0xff] %vm16, 0.0
  $region13: #{multiple_model_forward.1} parent=0 // pred_fallthru
    _
  %v19 = vld [vmem:[#allocation2] sm:$0xff]
  %v20 = vld [vmem:[#allocation2 + $0x8] sm:$0xff]
  %v21 = vld [vmem:[%s0] sm:$0xff]
  %v22 = vld [vmem:[%s0 + $0x8] sm:$0xff]
  %v23 = vld [vmem:[%s0 + $0x10] sm:$0xff]
  %v24 = vld [vmem:[%s0 + $0x18] sm:$0xff]
  %v25 = vld [vmem:[%s0 + $0x20] sm:$0xff]
  %v26 = vld [vmem:[%s0 + $0x28] sm:$0xff]
  %v27 = vld [vmem:[%s0 + $0x30] sm:$0xff]
  %v28 = vld [vmem:[%s0 + $0x38] sm:$0xff]
  %v29 = vld [vmem:[%s1] sm:$0xf]
  %v30 = vld [vmem:[%s1 + $0x4] sm:$0xf]
  %v31 = vld [vmem:[%s1 + $0x8] sm:$0xf]
  %v32 = vld [vmem:[%s1 + $0xc] sm:$0xf]
  %v33 = vld [vmem:[%s1 + $0x10] sm:$0xf]
  %v34 = vld [vmem:[%s1 + $0x14] sm:$0xf]
  %v35 = vld [vmem:[%s1 + $0x18] sm:$0xf]
  %v36 = vld [vmem:[%s1 + $0x1c] sm:$0xf]
  %v37 = vld [vmem:[%s1 + $0x20] sm:$0xf]
  %v38 = vld [vmem:[%s1 + $0x24] sm:$0xf]
  %v39 = vld [vmem:[%s1 + $0x28] sm:$0xf]
  %v40 = vld [vmem:[%s1 + $0x2c] sm:$0xf]
  %v41 = vld [vmem:[%s1 + $0x30] sm:$0xf]
  %v42 = vld [vmem:[%s1 + $0x34] sm:$0xf]
  %v43 = vld [vmem:[%s1 + $0x38] sm:$0xf]
  %v44 = vld [vmem:[%s1 + $0x3c] sm:$0xf]
  %v45 = vld [vmem:[%s1 + $0x40] sm:$0xf]
  %v46 = vld [vmem:[%s1 + $0x44] sm:$0xf]
  %v47 = vld [vmem:[%s1 + $0x48] sm:$0xf]
  %v48 = vld [vmem:[%s1 + $0x4c] sm:$0xf]
  %v49 = vld [vmem:[%s1 + $0x50] sm:$0xf]
  %v50 = vld [vmem:[%s1 + $0x54] sm:$0xf]
  %v51 = vld [vmem:[%s1 + $0x58] sm:$0xf]
  %v52 = vld [vmem:[%s1 + $0x5c] sm:$0xf]
  %v53 = vld [vmem:[%s1 + $0x60] sm:$0xf]
  %v54 = vld [vmem:[%s1 + $0x64] sm:$0xf]
  %v55 = vld [vmem:[%s1 + $0x68] sm:$0xf]
  %v56 = vld [vmem:[%s1 + $0x6c] sm:$0xf]
  %v57 = vld [vmem:[%s1 + $0x70] sm:$0xf]
  %v58 = vld [vmem:[%s1 + $0x74] sm:$0xf]
  %v59 = vld [vmem:[%s1 + $0x78] sm:$0xf]
  %v60 = vld [vmem:[%s1 + $0x7c] sm:$0xf]
  %v61 = vld [vmem:[%s1 + $0x80] sm:$0xf]
  %v62 = vld [vmem:[%s1 + $0x84] sm:$0xf]
  %v63 = vld [vmem:[%s1 + $0x88] sm:$0xf]
  %v64 = vld [vmem:[%s1 + $0x8c] sm:$0xf]
  %v65 = vld [vmem:[%s1 + $0x90] sm:$0xf]
  %v66 = vld [vmem:[%s1 + $0x94] sm:$0xf]
  %v67 = vld [vmem:[%s1 + $0x98] sm:$0xf]
  %v68 = vld [vmem:[%s1 + $0x9c] sm:$0xf]
  %v69 = vld [vmem:[%s1 + $0xa0] sm:$0xf]
  %v70 = vld [vmem:[%s1 + $0xa4] sm:$0xf]
  %v71 = vld [vmem:[%s1 + $0xa8] sm:$0xf]
  %v72 = vld [vmem:[%s1 + $0xac] sm:$0xf]
  %v73 = vld [vmem:[%s1 + $0xb0] sm:$0xf]
  %v74 = vld [vmem:[%s1 + $0xb4] sm:$0xf]
  %v75 = vld [vmem:[%s1 + $0xb8] sm:$0xf]
  %v76 = vld [vmem:[%s1 + $0xbc] sm:$0xf]
  %v77 = vld [vmem:[%s1 + $0xc0] sm:$0xf]
  %v78 = vld [vmem:[%s1 + $0xc4] sm:$0xf]
  %v79 = vld [vmem:[%s1 + $0xc8] sm:$0xf]
  %v80 = vld [vmem:[%s1 + $0xcc] sm:$0xf]
  %v81 = vld [vmem:[%s1 + $0xd0] sm:$0xf]
  %v82 = vld [vmem:[%s1 + $0xd4] sm:$0xf]
  %v83 = vld [vmem:[%s1 + $0xd8] sm:$0xf]
  %v84 = vld [vmem:[%s1 + $0xdc] sm:$0xf]
  %v85 = vld [vmem:[%s1 + $0xe0] sm:$0xf]
  %v86 = vld [vmem:[%s1 + $0xe4] sm:$0xf]
  %v87 = vld [vmem:[%s1 + $0xe8] sm:$0xf]
  %v88 = vld [vmem:[%s1 + $0xec] sm:$0xf]
  %v89 = vld [vmem:[%s1 + $0xf0] sm:$0xf]
  %v90 = vld [vmem:[%s1 + $0xf4] sm:$0xf]
  %v91 = vld [vmem:[%s1 + $0xf8] sm:$0xf]
  %v92 = vld [vmem:[%s1 + $0xfc] sm:$0xf]
  %v93 = vld [vmem:[%s1 + $0x100] sm:$0xf]
  %v94 = vld [vmem:[%s1 + $0x104] sm:$0xf]
  %v95 = vld [vmem:[%s1 + $0x108] sm:$0xf]
  %v96 = vld [vmem:[%s1 + $0x10c] sm:$0xf]
  %v97 = vld [vmem:[%s1 + $0x110] sm:$0xf]
  %v98 = vld [vmem:[%s1 + $0x114] sm:$0xf]
  %v99 = vld [vmem:[%s1 + $0x118] sm:$0xf]
  %v100 = vld [vmem:[%s1 + $0x11c] sm:$0xf]
  %v101 = vld [vmem:[%s1 + $0x120] sm:$0xf]
  %v102 = vld [vmem:[%s1 + $0x124] sm:$0xf]
  %v103 = vld [vmem:[%s1 + $0x128] sm:$0xf]
  %v104 = vld [vmem:[%s1 + $0x12c] sm:$0xf]
  %v105 = vld [vmem:[%s1 + $0x130] sm:$0xf]
  %v106 = vld [vmem:[%s1 + $0x134] sm:$0xf]
  %v107 = vld [vmem:[%s1 + $0x138] sm:$0xf]
  %v108 = vld [vmem:[%s1 + $0x13c] sm:$0xf]
  %v109 = vld [vmem:[%s1 + $0x140] sm:$0xf]
  %v110 = vld [vmem:[%s1 + $0x144] sm:$0xf]
  %v111 = vld [vmem:[%s1 + $0x148] sm:$0xf]
  %v112 = vld [vmem:[%s1 + $0x14c] sm:$0xf]
  %v113 = vld [vmem:[%s1 + $0x150] sm:$0xf]
  %v114 = vld [vmem:[%s1 + $0x154] sm:$0xf]
  %v115 = vld [vmem:[%s1 + $0x158] sm:$0xf]
  %v116 = vld [vmem:[%s1 + $0x15c] sm:$0xf]
  %v117 = vld [vmem:[%s1 + $0x160] sm:$0xf]
  %v118 = vld [vmem:[%s1 + $0x164] sm:$0xf]
  %v119 = vld [vmem:[%s1 + $0x168] sm:$0xf]
  %v120 = vld [vmem:[%s1 + $0x16c] sm:$0xf]
  %v121 = vld [vmem:[%s1 + $0x170] sm:$0xf]
  %v122 = vld [vmem:[%s1 + $0x174] sm:$0xf]
  %v123 = vld [vmem:[%s1 + $0x178] sm:$0xf]
  %v124 = vld [vmem:[%s1 + $0x17c] sm:$0xf]
  %v125 = vld [vmem:[%s1 + $0x180] sm:$0xf]
  %v126 = vld [vmem:[%s1 + $0x184] sm:$0xf]
  %v127 = vld [vmem:[%s1 + $0x188] sm:$0xf]
  %v128 = vld [vmem:[%s1 + $0x18c] sm:$0xf]
  %v129 = vld [vmem:[%s1 + $0x190] sm:$0xf]
  %v130 = vld [vmem:[%s1 + $0x194] sm:$0xf]
  %v131 = vld [vmem:[%s1 + $0x198] sm:$0xf]
  %v132 = vld [vmem:[%s1 + $0x19c] sm:$0xf]
  %v133 = vld [vmem:[%s1 + $0x1a0] sm:$0xf]
  %v134 = vld [vmem:[%s1 + $0x1a4] sm:$0xf]
  %v135 = vld [vmem:[%s1 + $0x1a8] sm:$0xf]
  %v136 = vld [vmem:[%s1 + $0x1ac] sm:$0xf]
  %v137 = vld [vmem:[%s1 + $0x1b0] sm:$0xf]
  %v138 = vld [vmem:[%s1 + $0x1b4] sm:$0xf]
  %v139 = vld [vmem:[%s1 + $0x1b8] sm:$0xf]
  %v140 = vld [vmem:[%s1 + $0x1bc] sm:$0xf]
  %v141 = vld [vmem:[%s1 + $0x1c0] sm:$0xf]
  %v142 = vld [vmem:[%s1 + $0x1c4] sm:$0xf]
  %v143 = vld [vmem:[%s1 + $0x1c8] sm:$0xf]
  %v144 = vld [vmem:[%s1 + $0x1cc] sm:$0xf]
  %v145 = vld [vmem:[%s1 + $0x1d0] sm:$0xf]
  %v146 = vld [vmem:[%s1 + $0x1d4] sm:$0xf]
  %v147 = vld [vmem:[%s1 + $0x1d8] sm:$0xf]
  %v148 = vld [vmem:[%s1 + $0x1dc] sm:$0xf]
  %v149 = vld [vmem:[%s1 + $0x1e0] sm:$0xf]
  %v150 = vld [vmem:[%s1 + $0x1e4] sm:$0xf]
  %v151 = vld [vmem:[%s1 + $0x1e8] sm:$0xf]
  %v152 = vld [vmem:[%s1 + $0x1ec] sm:$0xf]
  %v153 = vld [vmem:[%s1 + $0x1f0] sm:$0xf]
  %v154 = vld [vmem:[%s1 + $0x1f4] sm:$0xf]
  %v155 = vld [vmem:[%s1 + $0x1f8] sm:$0xf]
  %v156 = vld [vmem:[%s1 + $0x1fc] sm:$0xf]
  %v165 = vunpack.c.l.b16 %v21
  %v166 = vunpack.c.h.b16 %v21
  %v167 = vunpack.c.l.b16 %v22
  %v168 = vunpack.c.h.b16 %v22
  %v169 = vunpack.c.l.b16 %v23
  %v170 = vunpack.c.h.b16 %v23
  %v171 = vunpack.c.l.b16 %v24
  %v172 = vunpack.c.h.b16 %v24
  %v173 = vunpack.c.l.b16 %v25
  %v174 = vunpack.c.h.b16 %v25
  %v175 = vunpack.c.l.b16 %v26
  %v176 = vunpack.c.h.b16 %v26
  %v177 = vunpack.c.l.b16 %v27
  %v178 = vunpack.c.h.b16 %v27
  %v179 = vunpack.c.l.b16 %v28
  %v180 = vunpack.c.h.b16 %v28
  %v181 = vpack.c.b16 %v173, %v165
  %v182 = vpack.c.b16 %v174, %v166
  %v183 = vpack.c.b16 %v175, %v167
  %v184 = vpack.c.b16 %v176, %v168
  %v185 = vpack.c.b16 %v177, %v169
  %v186 = vpack.c.b16 %v178, %v170
  %v187 = vpack.c.b16 %v179, %v171
  %v188 = vpack.c.b16 %v180, %v172
  %v325 = vunpack.c.l.b16 %v29
  %v326 = vunpack.c.l.b16 %v30
  %v327 = vunpack.c.l.b16 %v31
  %v328 = vunpack.c.l.b16 %v32
  %v329 = vunpack.c.l.b16 %v33
  %v330 = vunpack.c.l.b16 %v34
  %v331 = vunpack.c.l.b16 %v35
  %v332 = vunpack.c.l.b16 %v36
  %v333 = vunpack.c.l.b16 %v37
  %v334 = vunpack.c.l.b16 %v38
  %v335 = vunpack.c.l.b16 %v39
  %v336 = vunpack.c.l.b16 %v40
  %v337 = vunpack.c.l.b16 %v41
  %v338 = vunpack.c.l.b16 %v42
  %v339 = vunpack.c.l.b16 %v43
  %v340 = vunpack.c.l.b16 %v44
  %v341 = vunpack.c.l.b16 %v45
  %v342 = vunpack.c.l.b16 %v46
  %v343 = vunpack.c.l.b16 %v47
  %v344 = vunpack.c.l.b16 %v48
  %v345 = vunpack.c.l.b16 %v49
  %v346 = vunpack.c.l.b16 %v50
  %v347 = vunpack.c.l.b16 %v51
  %v348 = vunpack.c.l.b16 %v52
  %v349 = vunpack.c.l.b16 %v53
  %v350 = vunpack.c.l.b16 %v54
  %v351 = vunpack.c.l.b16 %v55
  %v352 = vunpack.c.l.b16 %v56
  %v353 = vunpack.c.l.b16 %v57
  %v354 = vunpack.c.l.b16 %v58
  %v355 = vunpack.c.l.b16 %v59
  %v356 = vunpack.c.l.b16 %v60
  %v357 = vunpack.c.l.b16 %v61
  %v358 = vunpack.c.l.b16 %v62
  %v359 = vunpack.c.l.b16 %v63
  %v360 = vunpack.c.l.b16 %v64
  %v361 = vunpack.c.l.b16 %v65
  %v362 = vunpack.c.l.b16 %v66
  %v363 = vunpack.c.l.b16 %v67
  %v364 = vunpack.c.l.b16 %v68
  %v365 = vunpack.c.l.b16 %v69
  %v366 = vunpack.c.l.b16 %v70
  %v367 = vunpack.c.l.b16 %v71
  %v368 = vunpack.c.l.b16 %v72
  %v369 = vunpack.c.l.b16 %v73
  %v370 = vunpack.c.l.b16 %v74
  %v371 = vunpack.c.l.b16 %v75
  %v372 = vunpack.c.l.b16 %v76
  %v373 = vunpack.c.l.b16 %v77
  %v374 = vunpack.c.l.b16 %v78
  %v375 = vunpack.c.l.b16 %v79
  %v376 = vunpack.c.l.b16 %v80
  %v377 = vunpack.c.l.b16 %v81
  %v378 = vunpack.c.l.b16 %v82
  %v379 = vunpack.c.l.b16 %v83
  %v380 = vunpack.c.l.b16 %v84
  %v381 = vunpack.c.l.b16 %v85
  %v382 = vunpack.c.l.b16 %v86
  %v383 = vunpack.c.l.b16 %v87
  %v384 = vunpack.c.l.b16 %v88
  %v385 = vunpack.c.l.b16 %v89
  %v386 = vunpack.c.l.b16 %v90
  %v387 = vunpack.c.l.b16 %v91
  %v388 = vunpack.c.l.b16 %v92
  %v389 = vunpack.c.l.b16 %v93
  %v390 = vunpack.c.l.b16 %v94
  %v391 = vunpack.c.l.b16 %v95
  %v392 = vunpack.c.l.b16 %v96
  %v393 = vunpack.c.l.b16 %v97
  %v394 = vunpack.c.l.b16 %v98
  %v395 = vunpack.c.l.b16 %v99
  %v396 = vunpack.c.l.b16 %v100
  %v397 = vunpack.c.l.b16 %v101
  %v398 = vunpack.c.l.b16 %v102
  %v399 = vunpack.c.l.b16 %v103
  %v400 = vunpack.c.l.b16 %v104
  %v401 = vunpack.c.l.b16 %v105
  %v402 = vunpack.c.l.b16 %v106
  %v403 = vunpack.c.l.b16 %v107
  %v404 = vunpack.c.l.b16 %v108
  %v405 = vunpack.c.l.b16 %v109
  %v406 = vunpack.c.l.b16 %v110
  %v407 = vunpack.c.l.b16 %v111
  %v408 = vunpack.c.l.b16 %v112
  %v409 = vunpack.c.l.b16 %v113
  %v410 = vunpack.c.l.b16 %v114
  %v411 = vunpack.c.l.b16 %v115
  %v412 = vunpack.c.l.b16 %v116
  %v413 = vunpack.c.l.b16 %v117
  %v414 = vunpack.c.l.b16 %v118
  %v415 = vunpack.c.l.b16 %v119
  %v416 = vunpack.c.l.b16 %v120
  %v417 = vunpack.c.l.b16 %v121
  %v418 = vunpack.c.l.b16 %v122
  %v419 = vunpack.c.l.b16 %v123
  %v420 = vunpack.c.l.b16 %v124
  %v421 = vunpack.c.l.b16 %v125
  %v422 = vunpack.c.l.b16 %v126
  %v423 = vunpack.c.l.b16 %v127
  %v424 = vunpack.c.l.b16 %v128
  %v425 = vunpack.c.l.b16 %v129
  %v426 = vunpack.c.l.b16 %v130
  %v427 = vunpack.c.l.b16 %v131
  %v428 = vunpack.c.l.b16 %v132
  %v429 = vunpack.c.l.b16 %v133
  %v430 = vunpack.c.l.b16 %v134
  %v431 = vunpack.c.l.b16 %v135
  %v432 = vunpack.c.l.b16 %v136
  %v433 = vunpack.c.l.b16 %v137
  %v434 = vunpack.c.l.b16 %v138
  %v435 = vunpack.c.l.b16 %v139
  %v436 = vunpack.c.l.b16 %v140
  %v437 = vunpack.c.l.b16 %v141
  %v438 = vunpack.c.l.b16 %v142
  %v439 = vunpack.c.l.b16 %v143
  %v440 = vunpack.c.l.b16 %v144
  %v441 = vunpack.c.l.b16 %v145
  %v442 = vunpack.c.l.b16 %v146
  %v443 = vunpack.c.l.b16 %v147
  %v444 = vunpack.c.l.b16 %v148
  %v445 = vunpack.c.l.b16 %v149
  %v446 = vunpack.c.l.b16 %v150
  %v447 = vunpack.c.l.b16 %v151
  %v448 = vunpack.c.l.b16 %v152
  %v449 = vunpack.c.l.b16 %v153
  %v450 = vunpack.c.l.b16 %v154
  %v451 = vunpack.c.l.b16 %v155
  %v452 = vunpack.c.l.b16 %v156
  %v453 = vpack.c.b16 %v326, %v325
  %v454 = vpack.c.b16 %v328, %v327
  %v455 = vpack.c.b16 %v330, %v329
  %v456 = vpack.c.b16 %v332, %v331
  %v457 = vpack.c.b16 %v334, %v333
  %v458 = vpack.c.b16 %v336, %v335
  %v459 = vpack.c.b16 %v338, %v337
  %v460 = vpack.c.b16 %v340, %v339
  %v461 = vpack.c.b16 %v342, %v341
  %v462 = vpack.c.b16 %v344, %v343
  %v463 = vpack.c.b16 %v346, %v345
  %v464 = vpack.c.b16 %v348, %v347
  %v465 = vpack.c.b16 %v350, %v349
  %v466 = vpack.c.b16 %v352, %v351
  %v467 = vpack.c.b16 %v354, %v353
  %v468 = vpack.c.b16 %v356, %v355
  %v469 = vpack.c.b16 %v358, %v357
  %v470 = vpack.c.b16 %v360, %v359
  %v471 = vpack.c.b16 %v362, %v361
  %v472 = vpack.c.b16 %v364, %v363
  %v473 = vpack.c.b16 %v366, %v365
  %v474 = vpack.c.b16 %v368, %v367
  %v475 = vpack.c.b16 %v370, %v369
  %v476 = vpack.c.b16 %v372, %v371
  %v477 = vpack.c.b16 %v374, %v373
  %v478 = vpack.c.b16 %v376, %v375
  %v479 = vpack.c.b16 %v378, %v377
  %v480 = vpack.c.b16 %v380, %v379
  %v481 = vpack.c.b16 %v382, %v381
  %v482 = vpack.c.b16 %v384, %v383
  %v483 = vpack.c.b16 %v386, %v385
  %v484 = vpack.c.b16 %v388, %v387
  %v485 = vpack.c.b16 %v390, %v389
  %v486 = vpack.c.b16 %v392, %v391
  %v487 = vpack.c.b16 %v394, %v393
  %v488 = vpack.c.b16 %v396, %v395
  %v489 = vpack.c.b16 %v398, %v397
  %v490 = vpack.c.b16 %v400, %v399
  %v491 = vpack.c.b16 %v402, %v401
  %v492 = vpack.c.b16 %v404, %v403
  %v493 = vpack.c.b16 %v406, %v405
  %v494 = vpack.c.b16 %v408, %v407
  %v495 = vpack.c.b16 %v410, %v409
  %v496 = vpack.c.b16 %v412, %v411
  %v497 = vpack.c.b16 %v414, %v413
  %v498 = vpack.c.b16 %v416, %v415
  %v499 = vpack.c.b16 %v418, %v417
  %v500 = vpack.c.b16 %v420, %v419
  %v501 = vpack.c.b16 %v422, %v421
  %v502 = vpack.c.b16 %v424, %v423
  %v503 = vpack.c.b16 %v426, %v425
  %v504 = vpack.c.b16 %v428, %v427
  %v505 = vpack.c.b16 %v430, %v429
  %v506 = vpack.c.b16 %v432, %v431
  %v507 = vpack.c.b16 %v434, %v433
  %v508 = vpack.c.b16 %v436, %v435
  %v509 = vpack.c.b16 %v438, %v437
  %v510 = vpack.c.b16 %v440, %v439
  %v511 = vpack.c.b16 %v442, %v441
  %v512 = vpack.c.b16 %v444, %v443
  %v513 = vpack.c.b16 %v446, %v445
  %v514 = vpack.c.b16 %v448, %v447
  %v515 = vpack.c.b16 %v450, %v449
  %v516 = vpack.c.b16 %v452, %v451
  %581 = vmatprep.subr.bf16.mxu0 0
  %582 = vmatpush1.bf16.msra.mxu0 %v460
  %583 = vmatprep.subr.bf16.mxu0 0
  %584 = vmatpush1.bf16.msra.mxu0 %v459
  %585 = vmatprep.subr.bf16.mxu0 0
  %586 = vmatpush1.bf16.msra.mxu0 %v458
  %587 = vmatprep.subr.bf16.mxu0 0
  %588 = vmatpush1.bf16.msra.mxu0 %v457
  %589 = vmatprep.subr.bf16.mxu0 0
  %590 = vmatpush1.bf16.msra.mxu0 %v456
  %591 = vmatprep.subr.bf16.mxu0 0
  %592 = vmatpush1.bf16.msra.mxu0 %v455
  %593 = vmatprep.subr.bf16.mxu0 0
  %594 = vmatpush1.bf16.msra.mxu0 %v454
  %595 = vmatprep.subr.bf16.mxu0 0
  %596 = vmatpush1.bf16.msra.mxu0 %v453
  %597 = vmatprep.subr.bf16.mxu0 0
  %598 = vmatpush2.bf16.msra.mxu0 %v468
  %599 = vmatprep.subr.bf16.mxu0 0
  %600 = vmatpush2.bf16.msra.mxu0 %v467
  %601 = vmatprep.subr.bf16.mxu0 0
  %602 = vmatpush2.bf16.msra.mxu0 %v466
  %603 = vmatprep.subr.bf16.mxu0 0
  %604 = vmatpush2.bf16.msra.mxu0 %v465
  %605 = vmatprep.subr.bf16.mxu0 0
  %606 = vmatpush2.bf16.msra.mxu0 %v464
  %607 = vmatprep.subr.bf16.mxu0 0
  %608 = vmatpush2.bf16.msra.mxu0 %v463
  %609 = vmatprep.subr.bf16.mxu0 0
  %610 = vmatpush2.bf16.msra.mxu0 %v462
  %611 = vmatprep.subr.bf16.mxu0 0
  %612 = vmatpush2.bf16.msra.mxu0 %v461
  %613 = vmatprep.mubr.bf16.mxu0 %v182
  %614 = vmatmul.mubr.bf16.gmra.mxu0 %v181
  %v615 = vpop.f32.mrf.mxu0
  %v616 = vadd.f32 0.0, %v615
  %v617 = vpop.f32.mrf.mxu0
  %v618 = vpop.f32.mrf.mxu0
  %v619 = vadd.f32 0.0, %v618
  %v620 = vpop.f32.mrf.mxu0
  %621 = vdwg.mxu0
  %622 = vmatprep.subr.bf16.mxu0 0
  %623 = vmatpush1.bf16.msra.mxu0 %v476
  %624 = vmatprep.subr.bf16.mxu0 0
  %625 = vmatpush1.bf16.msra.mxu0 %v475
  %626 = vmatprep.subr.bf16.mxu0 0
  %627 = vmatpush1.bf16.msra.mxu0 %v474
  %628 = vmatprep.subr.bf16.mxu0 0
  %629 = vmatpush1.bf16.msra.mxu0 %v473
  %630 = vmatprep.subr.bf16.mxu0 0
  %631 = vmatpush1.bf16.msra.mxu0 %v472
  %632 = vmatprep.subr.bf16.mxu0 0
  %633 = vmatpush1.bf16.msra.mxu0 %v471
  %634 = vmatprep.subr.bf16.mxu0 0
  %635 = vmatpush1.bf16.msra.mxu0 %v470
  %636 = vmatprep.subr.bf16.mxu0 0
  %637 = vmatpush1.bf16.msra.mxu0 %v469
  %638 = vmatprep.subr.bf16.mxu0 0
  %639 = vmatpush2.bf16.msra.mxu0 %v484
  %640 = vmatprep.subr.bf16.mxu0 0
  %641 = vmatpush2.bf16.msra.mxu0 %v483
  %642 = vmatprep.subr.bf16.mxu0 0
  %643 = vmatpush2.bf16.msra.mxu0 %v482
  %644 = vmatprep.subr.bf16.mxu0 0
  %645 = vmatpush2.bf16.msra.mxu0 %v481
  %646 = vmatprep.subr.bf16.mxu0 0
  %647 = vmatpush2.bf16.msra.mxu0 %v480
  %648 = vmatprep.subr.bf16.mxu0 0
  %649 = vmatpush2.bf16.msra.mxu0 %v479
  %650 = vmatprep.subr.bf16.mxu0 0
  %651 = vmatpush2.bf16.msra.mxu0 %v478
  %652 = vmatprep.subr.bf16.mxu0 0
  %653 = vmatpush2.bf16.msra.mxu0 %v477
  %654 = vmatprep.mubr.bf16.mxu0 %v184
  %655 = vmatmul.mubr.bf16.gmra.mxu0 %v183
  %v656 = vpop.f32.mrf.mxu0
  %v657 = vadd.f32 %v616, %v656
  %v658 = vpop.f32.mrf.mxu0
  %v659 = vpop.f32.mrf.mxu0
  %v660 = vadd.f32 %v619, %v659
  %v661 = vpop.f32.mrf.mxu0
  %662 = vdwg.mxu0
  %663 = vmatprep.subr.bf16.mxu0 0
  %664 = vmatpush1.bf16.msra.mxu0 %v492
  %665 = vmatprep.subr.bf16.mxu0 0
  %666 = vmatpush1.bf16.msra.mxu0 %v491
  %667 = vmatprep.subr.bf16.mxu0 0
  %668 = vmatpush1.bf16.msra.mxu0 %v490
  %669 = vmatprep.subr.bf16.mxu0 0
  %670 = vmatpush1.bf16.msra.mxu0 %v489
  %671 = vmatprep.subr.bf16.mxu0 0
  %672 = vmatpush1.bf16.msra.mxu0 %v488
  %673 = vmatprep.subr.bf16.mxu0 0
  %674 = vmatpush1.bf16.msra.mxu0 %v487
  %675 = vmatprep.subr.bf16.mxu0 0
  %676 = vmatpush1.bf16.msra.mxu0 %v486
  %677 = vmatprep.subr.bf16.mxu0 0
  %678 = vmatpush1.bf16.msra.mxu0 %v485
  %679 = vmatprep.subr.bf16.mxu0 0
  %680 = vmatpush2.bf16.msra.mxu0 %v500
  %681 = vmatprep.subr.bf16.mxu0 0
  %682 = vmatpush2.bf16.msra.mxu0 %v499
  %683 = vmatprep.subr.bf16.mxu0 0
  %684 = vmatpush2.bf16.msra.mxu0 %v498
  %685 = vmatprep.subr.bf16.mxu0 0
  %686 = vmatpush2.bf16.msra.mxu0 %v497
  %687 = vmatprep.subr.bf16.mxu0 0
  %688 = vmatpush2.bf16.msra.mxu0 %v496
  %689 = vmatprep.subr.bf16.mxu0 0
  %690 = vmatpush2.bf16.msra.mxu0 %v495
  %691 = vmatprep.subr.bf16.mxu0 0
  %692 = vmatpush2.bf16.msra.mxu0 %v494
  %693 = vmatprep.subr.bf16.mxu0 0
  %694 = vmatpush2.bf16.msra.mxu0 %v493
  %695 = vmatprep.mubr.bf16.mxu0 %v186
  %696 = vmatmul.mubr.bf16.gmra.mxu0 %v185
  %v697 = vpop.f32.mrf.mxu0
  %v698 = vadd.f32 %v657, %v697
  %v699 = vpop.f32.mrf.mxu0
  %v700 = vpop.f32.mrf.mxu0
  %v701 = vadd.f32 %v660, %v700
  %v702 = vpop.f32.mrf.mxu0
  %703 = vdwg.mxu0
  %704 = vmatprep.subr.bf16.mxu0 0
  %705 = vmatpush1.bf16.msra.mxu0 %v508
  %706 = vmatprep.subr.bf16.mxu0 0
  %707 = vmatpush1.bf16.msra.mxu0 %v507
  %708 = vmatprep.subr.bf16.mxu0 0
  %709 = vmatpush1.bf16.msra.mxu0 %v506
  %710 = vmatprep.subr.bf16.mxu0 0
  %711 = vmatpush1.bf16.msra.mxu0 %v505
  %712 = vmatprep.subr.bf16.mxu0 0
  %713 = vmatpush1.bf16.msra.mxu0 %v504
  %714 = vmatprep.subr.bf16.mxu0 0
  %715 = vmatpush1.bf16.msra.mxu0 %v503
  %716 = vmatprep.subr.bf16.mxu0 0
  %717 = vmatpush1.bf16.msra.mxu0 %v502
  %718 = vmatprep.subr.bf16.mxu0 0
  %719 = vmatpush1.bf16.msra.mxu0 %v501
  %720 = vmatprep.subr.bf16.mxu0 0
  %721 = vmatpush2.bf16.msra.mxu0 %v516
  %722 = vmatprep.subr.bf16.mxu0 0
  %723 = vmatpush2.bf16.msra.mxu0 %v515
  %724 = vmatprep.subr.bf16.mxu0 0
  %725 = vmatpush2.bf16.msra.mxu0 %v514
  %726 = vmatprep.subr.bf16.mxu0 0
  %727 = vmatpush2.bf16.msra.mxu0 %v513
  %728 = vmatprep.subr.bf16.mxu0 0
  %729 = vmatpush2.bf16.msra.mxu0 %v512
  %730 = vmatprep.subr.bf16.mxu0 0
  %731 = vmatpush2.bf16.msra.mxu0 %v511
  %732 = vmatprep.subr.bf16.mxu0 0
  %733 = vmatpush2.bf16.msra.mxu0 %v510
  %734 = vmatprep.subr.bf16.mxu0 0
  %735 = vmatpush2.bf16.msra.mxu0 %v509
  %736 = vmatprep.mubr.bf16.mxu0 %v188
  %737 = vmatmul.mubr.bf16.gmra.mxu0 %v187
  %v738 = vpop.f32.mrf.mxu0
  %v739 = vadd.f32 %v698, %v738
  %v740 = vpop.f32.mrf.mxu0
  %v741 = vpop.f32.mrf.mxu0
  %v742 = vadd.f32 %v701, %v741
  %v743 = vpop.f32.mrf.mxu0
  %744 = vdwg.mxu0
  %v745 = vadd.f32 %v19, %v739
  %v746 = vadd.f32 %v20, %v742
  %vm747 = vcmask 64512
  %748 = vst.msk [vmem:[#allocation2] sm:$0xff] %vm747, %v745
  %749 = vst.msk [vmem:[#allocation2 + $0x8] sm:$0xff] %vm747, %v746
  // Predicated region
  $region14: #{multiple_model_forward.1} parent=0 // pred_check
    %p750 = pneg %p12
  $region15: #{multiple_model_forward.1} parent=0 // pred_check_branch
    %752 = sbr.rel (%p750) target = $region17
  $region16: #{multiple_model_forward.1} parent=0 // pred_region
    %v753 = vld [vmem:[#allocation2] sm:$0xff]
    %v754 = vld [vmem:[#allocation2 + $0x8] sm:$0xff]
    %755 = vst.msk [vmem:[%s2] sm:$0xff] %vm747, %v753
    %756 = vst.msk [vmem:[%s2 + $0x8] sm:$0xff] %vm747, %v754
  $region17: #{multiple_model_forward.1} parent=0 // pred_fallthru
    _
  // Predicated region
  $region18: #{multiple_model_forward.1} parent=0 // pred_check
    _
  $region19: #{multiple_model_forward.1} parent=0 // pred_check_branch
    %758 = sbr.rel (0) target = $region21
  $region20: #{multiple_model_forward.1} parent=0 // pred_region
    _
  $region21: #{multiple_model_forward.1} parent=0 // pred_fallthru
    _
  // Predicated region
  $region22: #{multiple_model_forward.1} parent=0 // pred_check
    _
  $region23: #{multiple_model_forward.1} parent=0 // pred_check_branch
    %760 = sbr.rel (0) target = $region25
  $region24: #{multiple_model_forward.1} parent=0 // pred_region
    _
  $region25: #{multiple_model_forward.1} parent=0 // pred_fallthru
    _

</llo_original>
